<compile_context>
chip_gen: v6e
topology: v6e:2x2x1
jax: 0.10.0
libtpu: 0.0.40
codegen_flags: <defaults>
</compile_context>

<pallas_src>
import jax
import jax.numpy as jnp
from jax.experimental import pallas as pl
from jax.experimental.pallas import tpu as pltpu


def predict_head_kernel(x_ref, w_ref, b_ref, o_ref):
    # x_ref: (1, C, tn, D) block of the native-layout embedding
    # w_ref: (D, Vp)  == weight.T / C (1/C folded in);  b_ref: (1, Vp)
    # o_ref: (1, tn, Vp) block (clipped to the real V on writeback)
    x = x_ref[0].astype(jnp.float32)                       # (C, tn, D)
    pooled = jnp.sum(x, axis=0)                            # channel sum -> (tn, D)
    # dropout = Identity (head_dropout == 0)
    logits = jnp.dot(pooled, w_ref[...],
                     preferred_element_type=jnp.float32)   # (tn, Vp) on MXU
    logits = logits + b_ref[...]                           # broadcast bias (1, Vp)
    # numerically-stable log-softmax over the (padded) vocab dim
    m = jnp.max(logits, axis=-1, keepdims=True)
    shifted = logits - m
    lse = jnp.log(jnp.sum(jnp.exp(shifted), axis=-1, keepdims=True))
    o_ref[0] = (shifted - lse).astype(o_ref.dtype)


def predict_head(embedding, weight, bias, *, tn=256):
    """embedding: (B, C, N, D); weight: (V, D) [torch Linear layout]; bias: (V,)."""
    B, C, N, D = embedding.shape
    V = weight.shape[0]
    in_item = jnp.dtype(embedding.dtype).itemsize

    # Padded (lane-aligned) vocab used for the in-kernel math.  Padded weight
    # columns are 0 and padded bias is -1e30, so padded logits contribute
    # exp() == 0 and the log-softmax over the real V columns is exact.
    Vp = ((V + 127) // 128) * 128
    pad_v = Vp - V
    w_scaled = weight.T.astype(jnp.float32) / float(C)     # fold 1/C (trace-time op)
    bias_f32 = bias.astype(jnp.float32)
    if pad_v:
        w_scaled = jnp.pad(w_scaled, ((0, 0), (0, pad_v)))
        bias_f32 = jnp.pad(bias_f32, (0, pad_v), constant_values=-1e30)
    bias2 = bias_f32.reshape(1, Vp)

    # Row tile along the patch axis: multiple of 8 (sublanes) or the full N.
    def _clamp_tn(t):
        t = min(t, N)
        if t < N:
            t = max(8, (t // 8) * 8)
        return t

    tn_eff = _clamp_tn(tn)

    def _per_step(t):
        return (2 * C * t * D * in_item        # embedding tile, double-buffered
                + 2 * t * Vp * 4               # output tile (f32), double-buffered
                + 2 * (D * Vp + Vp) * 4)       # weight + bias (resident)

    # Shrink the row tile if the pipeline footprint would blow the VMEM budget.
    budget = 24 << 20
    while tn_eff > 8 and tn_eff < N and _per_step(tn_eff) > budget:
        tn_eff = _clamp_tn(tn_eff // 2)

    grid_n = pl.cdiv(N, tn_eff)          # boundary blocks handled by Pallas clipping
    vmem_limit = int(min(max(_per_step(tn_eff) + (8 << 20), 32 << 20), 48 << 20))

    # Output array keeps the TRUE vocab size; the (1, tn, Vp) block is clipped
    # on writeback, so no wrapper-side slice / extra HBM pass is needed.
    return pl.pallas_call(
        predict_head_kernel,
        out_shape=jax.ShapeDtypeStruct((B, N, V), jnp.float32),
        grid_spec=pltpu.PrefetchScalarGridSpec(
            num_scalar_prefetch=0,
            grid=(B, grid_n),
            in_specs=[
                pl.BlockSpec((1, C, tn_eff, D), lambda b, j: (b, 0, j, 0)),
                pl.BlockSpec((D, Vp), lambda b, j: (0, 0)),
                pl.BlockSpec((1, Vp), lambda b, j: (0, 0)),
            ],
            out_specs=pl.BlockSpec((1, tn_eff, Vp), lambda b, j: (b, j, 0)),
        ),
        compiler_params=pltpu.CompilerParams(
            dimension_semantics=("parallel", "parallel"),
            vmem_limit_bytes=vmem_limit),
    )(embedding, w_scaled, bias2)


def predict_head_reference(embedding, weight, bias):
    pooled = jnp.mean(embedding.astype(jnp.float32), axis=1)   # (B, N, D)
    logits = pooled @ weight.T.astype(jnp.float32) + bias      # (B, N, V)
    return jax.nn.log_softmax(logits, axis=-1)


if __name__ == "__main__":
    # Small, module-consistent shapes: batch, channels, num_patches, d_model, vocab.
    B, C, N, D, V = 2, 4, 8, 32, 64

    key = jax.random.PRNGKey(0)
    k_emb, k_w, k_b = jax.random.split(key, 3)

    embedding = jax.random.normal(k_emb, (B, C, N, D), dtype=jnp.float32)
    # Deterministic nn.Linear(d_model, vocab_size) params (torch layout: (V, D)).
    weight = jax.random.normal(k_w, (V, D), dtype=jnp.float32) * (1.0 / jnp.sqrt(D))
    bias = jax.random.normal(k_b, (V,), dtype=jnp.float32) * 0.01

    out = jax.block_until_ready(predict_head(embedding, weight, bias))
    ref = predict_head_reference(embedding, weight, bias)
    assert out.shape == (B, N, V)
    assert jnp.allclose(out, ref, atol=1e-5, rtol=1e-5), "mismatch vs reference"

    # Second check: multi-block grid with an N remainder (exercises boundary
    # clipping on both the patch and vocab axes) and a bf16 embedding
    # (exercises the in-kernel upcast path).
    B2, C2, N2 = 2, 4, 20
    emb_bf16 = jax.random.normal(k_emb, (B2, C2, N2, D), dtype=jnp.bfloat16)
    out2 = jax.block_until_ready(predict_head(emb_bf16, weight, bias, tn=16))
    ref2 = predict_head_reference(emb_bf16.astype(jnp.float32), weight, bias)
    assert out2.shape == (B2, N2, V)
    assert jnp.allclose(out2, ref2, atol=1e-4, rtol=1e-4), "mismatch (bf16/remainder)"

    print("KERNEL_OK")
</pallas_src>

<mosaic_0001>
module attributes {stable_mosaic.version = 11 : i64} {
  func.func @predict_head_kernel(%arg0: i32, %arg1: i32, %arg2: memref<1x4x8x32xf32, #tpu.memory_space<vmem>>, %arg3: memref<32x128xf32, #tpu.memory_space<vmem>>, %arg4: memref<1x128xf32, #tpu.memory_space<vmem>>, %arg5: memref<1x8x128xf32, #tpu.memory_space<vmem>>) attributes {dimension_semantics = [#tpu.dimension_semantics<parallel>, #tpu.dimension_semantics<parallel>], iteration_bounds = array<i64: 2, 1>, scalar_prefetch = 0 : i64, scratch_operands = 0 : i64, tpu.core_type = #tpu.core_type<tc>, window_params = [{transform_indices = @transform_0, window_bounds = array<i64: 1, 4, 8, 32>}, {pipeline_mode = #tpu.pipeline_mode<synchronous>, transform_indices = @transform_1, window_bounds = array<i64: 32, 128>}, {pipeline_mode = #tpu.pipeline_mode<synchronous>, transform_indices = @transform_2, window_bounds = array<i64: 1, 128>}, {transform_indices = @transform_3, window_bounds = array<i64: 1, 8, 128>}]} {
    %c0 = arith.constant 0 : index
    %c0_0 = arith.constant 0 : index
    %c0_1 = arith.constant 0 : index
    %c0_2 = arith.constant 0 : index
    %0 = vector.load %arg2[%c0, %c0_0, %c0_1, %c0_2] : memref<1x4x8x32xf32, #tpu.memory_space<vmem>>, vector<1x4x8x32xf32>
    %1 = vector.shape_cast %0 : vector<1x4x8x32xf32> to vector<4x8x32xf32>
    %cst = arith.constant dense<0.000000e+00> : vector<8x32xf32>
    %2 = vector.multi_reduction <add>, %1, %cst [0] : vector<4x8x32xf32> to vector<8x32xf32>
    %c0_3 = arith.constant 0 : index
    %c0_4 = arith.constant 0 : index
    %3 = vector.load %arg3[%c0_3, %c0_4] : memref<32x128xf32, #tpu.memory_space<vmem>>, vector<32x128xf32>
    %cst_5 = arith.constant dense<0.000000e+00> : vector<8x128xf32>
    %4 = tpu.matmul %2, %3, %cst_5 {dimension_numbers = #tpu.dot_dimension_numbers<[1], [0], [0], [1], [0, 0, 1, 1], [], []>} : vector<8x32xf32>, vector<32x128xf32>, vector<8x128xf32> -> vector<8x128xf32>
    %c0_6 = arith.constant 0 : index
    %c0_7 = arith.constant 0 : index
    %5 = vector.load %arg4[%c0_6, %c0_7] : memref<1x128xf32, #tpu.memory_space<vmem>>, vector<1x128xf32>
    %6 = vector.broadcast %5 : vector<1x128xf32> to vector<8x128xf32>
    %7 = arith.addf %4, %6 : vector<8x128xf32>
    %cst_8 = arith.constant dense<0xFF800000> : vector<8xf32>
    %8 = vector.multi_reduction <maximumf>, %7, %cst_8 [1] : vector<8x128xf32> to vector<8xf32>
    %9 = vector.shape_cast %8 : vector<8xf32> to vector<8x1xf32>
    %10 = vector.broadcast %9 : vector<8x1xf32> to vector<8x128xf32>
    %11 = arith.subf %7, %10 : vector<8x128xf32>
    %12 = math.exp %11 : vector<8x128xf32>
    %cst_9 = arith.constant dense<0.000000e+00> : vector<8xf32>
    %13 = vector.multi_reduction <add>, %12, %cst_9 [1] : vector<8x128xf32> to vector<8xf32>
    %14 = vector.shape_cast %13 : vector<8xf32> to vector<8x1xf32>
    %15 = math.log %14 : vector<8x1xf32>
    %16 = vector.broadcast %15 : vector<8x1xf32> to vector<8x128xf32>
    %17 = arith.subf %11, %16 : vector<8x128xf32>
    %c0_10 = arith.constant 0 : index
    %c0_11 = arith.constant 0 : index
    %c0_12 = arith.constant 0 : index
    %18 = vector.load %arg5[%c0_10, %c0_11, %c0_12] : memref<1x8x128xf32, #tpu.memory_space<vmem>>, vector<1x8x128xf32>
    %19 = vector.shape_cast %18 : vector<1x8x128xf32> to vector<8x128xf32>
    %20 = vector.shape_cast %17 : vector<8x128xf32> to vector<1x8x128xf32>
    tpu.vector_store %arg5[%c0_10, %c0_11, %c0_12], %20 {strides = array<i32>} : memref<1x8x128xf32, #tpu.memory_space<vmem>>, vector<1x8x128xf32>,
    return
  }
  func.func @transform_0(%arg0: i32, %arg1: i32) -> (i32, i32, i32, i32) {
    %c0_i32 = arith.constant 0 : i32
    %c0_i32_0 = arith.constant 0 : i32
    %c0_i32_1 = arith.constant 0 : i32
    return %arg0, %c0_i32, %arg1, %c0_i32_0 : i32, i32, i32, i32
  }
  func.func @transform_1(%arg0: i32, %arg1: i32) -> (i32, i32) {
    %c0_i32 = arith.constant 0 : i32
    %c0_i32_0 = arith.constant 0 : i32
    %c0_i32_1 = arith.constant 0 : i32
    return %c0_i32, %c0_i32_0 : i32, i32
  }
  func.func @transform_2(%arg0: i32, %arg1: i32) -> (i32, i32) {
    %c0_i32 = arith.constant 0 : i32
    %c0_i32_0 = arith.constant 0 : i32
    %c0_i32_1 = arith.constant 0 : i32
    return %c0_i32, %c0_i32_0 : i32, i32
  }
  func.func @transform_3(%arg0: i32, %arg1: i32) -> (i32, i32, i32) {
    %c0_i32 = arith.constant 0 : i32
    %c0_i32_0 = arith.constant 0 : i32
    return %arg0, %arg1, %c0_i32 : i32, i32, i32
  }
}

</mosaic_0001>

<llo_original>
// kernel: tpu_custom_call.1
$region0: #{tpu_custom_call.1}
  #allocation0 [shape = 'u32[]', space=smem, size = 0x4, offset = 0x4, fixed_abs, tag = 'smem constant byte address 0x4 - core index']
  #allocation1 [shape = 'u32[144,128]{1,0:T(1,128)}', space=vmem, size = 0x12000, scoped, tag = 'internal scratch']
  %s0 = inlined_call_operand.hbm [shape: f32[2,4,8,32], index: 0, kind: input, shape index: {}]
  %s1 = inlined_call_operand.hbm [shape: f32[32,128], index: 1, kind: input, shape index: {}]
  %s2 = inlined_call_operand.vmem [shape: f32[1,128], index: 2, kind: input, shape index: {}]
  %s3 = inlined_call_operand.hbm [shape: f32[2,8,64], index: 3, kind: output, shape index: {}]
  %s4 = sld [smem:[#allocation0]]
  $region53: #{tpu_custom_call.1} parent=0
    _
  %s6 = ssub.s32 1, %s4
  %s7 = scalar_select 0, %s6, %s4
  $region1: #{tpu_custom_call.1} parent=0
    #allocation2 [shape = 'u8[32768]{0}', space=vmem, size = 0x8000, scoped, tag = 'input window, operand 0']
    #allocation3 [shape = 's32[2]{0}', space=sflag, size = 0x8, scoped, tag = 'scoped memory for tpu_custom_call.1']
    #allocation4 [shape = 's32[2]{0}', space=sflag, size = 0x8, scoped, tag = 'scoped memory for tpu_custom_call.1']
    #allocation5 [shape = 'u8[16384]{0}', space=vmem, size = 0x4000, scoped, tag = 'input window, operand 1, single buffered']
    #allocation6 [shape = 's32[1]{0}', space=sflag, size = 0x4, scoped, tag = 'scoped memory for tpu_custom_call.1']
    #allocation7 [shape = 'u8[8192]{0}', space=vmem, size = 0x2000, scoped, tag = 'output window, operand 0']
    %8 = vsyncpa [#allocation3], 0
    %s9 = scalar_lea.sflag [#allocation3], 1
    %10 = vsyncpa %s9, 0
    %11 = vsyncpa [#allocation6], 0
    %12 = vsyncpa [#allocation4], 0
    %s13 = scalar_lea.sflag [#allocation4], 1
    %14 = vsyncpa %s13, 0
    loop: start=0, step=1, limit=4
    $region2: #{tpu_custom_call.1} parent=1 // loop_pre_header
      _
    $region3: #{tpu_custom_call.1} parent=1 // loop_header
      %s16 = sphi 0, %s20
      %p17 = scmp.ge.s32.totalorder %s16, 4
      %s23 = sphi 0, %s35
      %s24 = sphi 0, %s31
      %s25 = sphi 0, %s23
      %s26 = sphi 0, %s24
      %s27 = sphi 0, %s25
      %s28 = sphi 0, %s26
      %s40 = sphi 0, %s42
      %s43 = sphi 0, %s40
      %s44 = sphi 0, %s43
      %s60 = sphi 0, %s44
      %s64 = sphi 0, %s64
      %s66 = sphi 0, %s64
      %s67 = sphi 0, %s66
      %s81 = sphi 0, %s67
      %s85 = sphi 0, %s85
      %s87 = sphi 0, %s85
      %s88 = sphi 0, %s87
      %s102 = sphi 0, %s88
      %s110 = sphi 0, %s112
      %s113 = sphi 0, %s110
      %s114 = sphi 0, %s113
      %s130 = sphi 0, %s114
    $region4: #{tpu_custom_call.1} parent=1 // loop_header_branch
      %19 = sbr.rel (%p17) target = $region8
    $region5: #{tpu_custom_call.1} parent=1 // loop_body
      %s21 = ssub.s32 %s16, 1
      %s22 = ssub.s32 %s16, 2
      %s29 = sadd.s32 1, %s24
      %p30 = scmp.ge.s32.totalorder %s29, 1
      %s31 = scalar_select %p30, 0, %s29
      %s32 = sadd.s32 1, %s23
      %s33 = scalar_select %p30, %s32, %s23
      %p34 = scmp.ge.s32.totalorder %s33, 2
      %s35 = scalar_select %p34, 0, %s33
      %s36 = ssub.s32 %s23, %s35
      %s37 = ssub.s32 %s24, %s31
      %s38 = sor.u32 %s36, %s37
      %p39 = scmp.eq.s32.totalorder %s38, 0
      %s41 = sadd.s32 %s40, 1
      %s42 = scalar_select %p39, %s40, %s41
      %p45 = pneg %p39
      %p46 = scmp.eq.s32.totalorder %s16, 1
      %p47 = por %p45, %p46
      %p48 = scmp.ne.s32.totalorder %s40, %s43
      %p49 = scmp.eq.s32.totalorder %s16, 0
      %p50 = por %p48, %p49
      %p51 = scmp.ne.s32.totalorder %s40, %s43
      %p52 = scmp.eq.s32.totalorder %s21, 1
      %p53 = por %p51, %p52
      %p54 = scmp.ne.s32.totalorder %s43, %s44
      %p55 = scmp.eq.s32.totalorder %s21, 0
      %p56 = por %p54, %p55
      %p57 = scmp.ne.s32.totalorder %s43, %s44
      %p58 = scmp.eq.s32.totalorder %s22, 1
      %p59 = por %p57, %p58
      %p61 = scmp.ne.s32.totalorder %s44, %s60
      %p62 = scmp.eq.s32.totalorder %s22, 0
      %p63 = por %p61, %p62
      %s65 = sadd.s32 %s64, 1
      %p68 = scmp.eq.s32.totalorder %s16, 1
      %p69 = scmp.ne.s32.totalorder %s64, %s66
      %p70 = scmp.eq.s32.totalorder %s16, 0
      %p71 = por %p69, %p70
      %p72 = scmp.ne.s32.totalorder %s64, %s66
      %p73 = scmp.eq.s32.totalorder %s21, 1
      %p74 = por %p72, %p73
      %p75 = scmp.ne.s32.totalorder %s66, %s67
      %p76 = scmp.eq.s32.totalorder %s21, 0
      %p77 = por %p75, %p76
      %p78 = scmp.ne.s32.totalorder %s66, %s67
      %p79 = scmp.eq.s32.totalorder %s22, 1
      %p80 = por %p78, %p79
      %p82 = scmp.ne.s32.totalorder %s67, %s81
      %p83 = scmp.eq.s32.totalorder %s22, 0
      %p84 = por %p82, %p83
      %s86 = sadd.s32 %s85, 1
      %p89 = scmp.eq.s32.totalorder %s16, 1
      %p90 = scmp.ne.s32.totalorder %s85, %s87
      %p91 = scmp.eq.s32.totalorder %s16, 0
      %p92 = por %p90, %p91
      %p93 = scmp.ne.s32.totalorder %s85, %s87
      %p94 = scmp.eq.s32.totalorder %s21, 1
      %p95 = por %p93, %p94
      %p96 = scmp.ne.s32.totalorder %s87, %s88
      %p97 = scmp.eq.s32.totalorder %s21, 0
      %p98 = por %p96, %p97
      %p99 = scmp.ne.s32.totalorder %s87, %s88
      %p100 = scmp.eq.s32.totalorder %s22, 1
      %p101 = por %p99, %p100
      %p103 = scmp.ne.s32.totalorder %s88, %s102
      %p104 = scmp.eq.s32.totalorder %s22, 0
      %p105 = por %p103, %p104
      %s106 = ssub.s32 %s23, %s35
      %s107 = ssub.s32 %s24, %s31
      %s108 = sor.u32 %s106, %s107
      %p109 = scmp.eq.s32.totalorder %s108, 0
      %s111 = sadd.s32 %s110, 1
      %s112 = scalar_select %p109, %s110, %s111
      %p115 = pneg %p109
      %p116 = scmp.eq.s32.totalorder %s16, 1
      %p117 = por %p115, %p116
      %p118 = scmp.ne.s32.totalorder %s110, %s113
      %p119 = scmp.eq.s32.totalorder %s16, 0
      %p120 = por %p118, %p119
      %p121 = scmp.ne.s32.totalorder %s110, %s113
      %p122 = scmp.eq.s32.totalorder %s21, 1
      %p123 = por %p121, %p122
      %p124 = scmp.ne.s32.totalorder %s113, %s114
      %p125 = scmp.eq.s32.totalorder %s21, 0
      %p126 = por %p124, %p125
      %p127 = scmp.ne.s32.totalorder %s113, %s114
      %p128 = scmp.eq.s32.totalorder %s22, 1
      %p129 = por %p127, %p128
      %p131 = scmp.ne.s32.totalorder %s114, %s130
      %p132 = scmp.eq.s32.totalorder %s22, 0
      %p133 = por %p131, %p132
      %p134 = scmp.le.s32.totalorder 1, %s16
      %p135 = scmp.lt.s32.totalorder %s16, 3
      %p136 = pnand %p134, %p135
      %p137 = pneg %p136
      // Predicated region
      $region9: #{tpu_custom_call.1} parent=5 // pred_check
        _
      $region10: #{tpu_custom_call.1} parent=5 // pred_check_branch
        %139 = sbr.rel (%p136) target = $region12
      $region11: #{tpu_custom_call.1} parent=5 // pred_region
        %s140 = ssub.s32 %s16, 1
        // Predicated region
        $region13: #{tpu_custom_call.1} parent=11 // pred_check
          %p141 = pneg %p77
        $region14: #{tpu_custom_call.1} parent=11 // pred_check_branch
          %143 = sbr.rel (%p141) target = $region16
        $region15: #{tpu_custom_call.1} parent=11 // pred_region
          %s145 = ssub.s32 512, 512
          %146 = vsyncadd [#allocation6], %s145
          %s147 = sshll.u32 [#allocation5], 4
          %s148 = int_to_ptr.vmem [resolvable:$true] %s147
          %153 = dma.hbm_to_vmem [thread:$0]  %s1, 512, %s148, [#allocation6], 128, 128, 8
        $region16: #{tpu_custom_call.1} parent=11 // pred_fallthru
          _
        // Predicated region
        $region17: #{tpu_custom_call.1} parent=11 // pred_check
          %p154 = pneg %p98
        $region18: #{tpu_custom_call.1} parent=11 // pred_check_branch
          %156 = sbr.rel (%p154) target = $region20
        $region19: #{tpu_custom_call.1} parent=11 // pred_region
          _
        $region20: #{tpu_custom_call.1} parent=11 // pred_fallthru
          _
      $region12: #{tpu_custom_call.1} parent=5 // pred_fallthru
        _
      %p157 = scmp.lt.s32.totalorder %s16, 2
      // Predicated region
      $region21: #{tpu_custom_call.1} parent=5 // pred_check
        %p158 = pneg %p157
      $region22: #{tpu_custom_call.1} parent=5 // pred_check_branch
        %160 = sbr.rel (%p158) target = $region24
      $region23: #{tpu_custom_call.1} parent=5 // pred_region
        // Predicated region
        $region25: #{tpu_custom_call.1} parent=23 // pred_check
          %p161 = pneg %p50
        $region26: #{tpu_custom_call.1} parent=23 // pred_check_branch
          %163 = sbr.rel (%p161) target = $region28
        $region27: #{tpu_custom_call.1} parent=23 // pred_region
          %s164 = sand.u32 %s40, 1
          %s165 = scalar_lea.sflag [#allocation3], %s164
          %s166 = sand.u32 %s40, 1
          %s167 = smul.addr %s166, 32
          %s168 = scalar_lea.vmem [#allocation2], %s167
          %s170 = ssub.s32 512, 512
          %171 = vsyncadd %s165, %s170
          %s172 = smul.addr %s23, 4
          %s173 = sadd.s32 %s24, %s172
          %s174 = smul.addr %s173, 128
          %s175 = scalar_lea.hbm %s0, %s174
          %s176 = sshll.u32 %s168, 4
          %s177 = int_to_ptr.vmem [resolvable:$true] %s176
          %182 = dma.hbm_to_vmem [thread:$0]  %s175, 512, %s177, %s165, 128, 128, 8
        $region28: #{tpu_custom_call.1} parent=23 // pred_fallthru
          _
      $region24: #{tpu_custom_call.1} parent=5 // pred_fallthru
        _
      %p183 = scmp.le.s32.totalorder 1, %s16
      %p184 = scmp.lt.s32.totalorder %s16, 3
      %p185 = pnand %p183, %p184
      %p186 = pneg %p185
      // Predicated region
      $region29: #{tpu_custom_call.1} parent=5 // pred_check
        _
      $region30: #{tpu_custom_call.1} parent=5 // pred_check_branch
        %188 = sbr.rel (%p185) target = $region32
      $region31: #{tpu_custom_call.1} parent=5 // pred_region
        %s189 = ssub.s32 %s16, 1
        %s190 = sand.u32 %s43, 1
        %s191 = scalar_lea.sflag [#allocation3], %s190
        %s192 = sand.u32 %s43, 1
        %s193 = smul.addr %s192, 32
        %s194 = scalar_lea.vmem [#allocation2], %s193
        // Predicated region
        $region33: #{tpu_custom_call.1} parent=31 // pred_check
          %p195 = pneg %p56
        $region34: #{tpu_custom_call.1} parent=31 // pred_check_branch
          %197 = sbr.rel (%p195) target = $region36
        $region35: #{tpu_custom_call.1} parent=31 // pred_region
          %198 = dma.done %s191, 512
        $region36: #{tpu_custom_call.1} parent=31 // pred_fallthru
          _
        // Predicated region
        $region37: #{tpu_custom_call.1} parent=31 // pred_check
          %p199 = pneg %p77
        $region38: #{tpu_custom_call.1} parent=31 // pred_check_branch
          %201 = sbr.rel (%p199) target = $region40
        $region39: #{tpu_custom_call.1} parent=31 // pred_region
          %202 = dma.done [#allocation6], 512
        $region40: #{tpu_custom_call.1} parent=31 // pred_fallthru
          _
        %s203 = sand.u32 %s43, 1
        %s204 = scalar_lea.sflag [#allocation3], %s203
        %s205 = sand.u32 %s43, 1
        %s206 = smul.addr %s205, 32
        %s207 = scalar_lea.vmem [#allocation2], %s206
        %p208 = pneg %p56
        %p209 = pneg %p53
        %p210 = pneg %p77
        %p211 = pneg %p74
        %p212 = pneg %p98
        %p213 = pneg %p95
        %p214 = pneg %p126
        %p215 = pneg %p123
        %s216 = sand.u32 %s113, 1
        %s217 = scalar_lea.sflag [#allocation4], %s216
        %s218 = sand.u32 %s113, 1
        %s219 = smul.addr %s218, 8
        %s220 = scalar_lea.vmem [#allocation7], %s219
        %v221 = vld [vmem:[%s194] sm:$0xff]
        %v222 = vld [vmem:[%s194 + $0x8] sm:$0xff]
        %v223 = vld [vmem:[%s194 + $0x10] sm:$0xff]
        %v224 = vld [vmem:[%s194 + $0x18] sm:$0xff]
        %vm225 = vcmask 261120
        %v226 = vsel %vm225, %v221, 0.0
        %v227 = vsel %vm225, %v222, 0.0
        %v228 = vadd.f32 %v226, %v227
        %v229 = vsel %vm225, %v223, 0.0
        %v230 = vadd.f32 %v228, %v229
        %v231 = vsel %vm225, %v224, 0.0
        %v232 = vadd.f32 %v230, %v231
        %v233 = vld [vmem:[#allocation5] sm:$0xff]
        %v234 = vld [vmem:[#allocation5 + $0x8] sm:$0xff]
        %v235 = vld [vmem:[#allocation5 + $0x10] sm:$0xff]
        %v236 = vld [vmem:[#allocation5 + $0x18] sm:$0xff]
        %v237 = vld [vmem:[%s2] sm:$0x1]
        %v239 = vlaneseq
        %v240 = vshrl.u32 %v239, 7
        %v241 = vsub.s32 0, %v240
        %v242 = vrot.slane %v237, %v241
        %v245 = vsel %vm225, %v232, 0
        %247 = vmatprep.subr.mxu0 0.0
        %248 = vmatpush1.msra.mxu0 0.0
        %249 = vmatprep.subr.mxu0 0.0
        %250 = vmatpush1.msra.mxu0 0.0
        %251 = vmatprep.subr.mxu0 0.0
        %252 = vmatpush1.msra.mxu0 0.0
        %253 = vmatprep.subr.mxu0 0.0
        %254 = vmatpush1.msra.mxu0 0.0
        %255 = vmatprep.subr.mxu0 0.0
        %256 = vmatpush1.msra.mxu0 0.0
        %257 = vmatprep.subr.mxu0 0.0
        %258 = vmatpush1.msra.mxu0 0.0
        %259 = vmatprep.subr.mxu0 0.0
        %260 = vmatpush1.msra.mxu0 0.0
        %261 = vmatprep.subr.mxu0 0.0
        %262 = vmatpush1.msra.mxu0 0.0
        %263 = vmatprep.subr.mxu0 0.0
        %264 = vmatpush1.msra.mxu0 0.0
        %265 = vmatprep.subr.mxu0 0.0
        %266 = vmatpush1.msra.mxu0 0.0
        %267 = vmatprep.subr.mxu0 0.0
        %268 = vmatpush1.msra.mxu0 0.0
        %269 = vmatprep.subr.mxu0 0.0
        %270 = vmatpush1.msra.mxu0 0.0
        %271 = vmatprep.subr.mxu0 0.0
        %272 = vmatpush1.msra.mxu0 %v236
        %273 = vmatprep.subr.mxu0 0.0
        %274 = vmatpush1.msra.mxu0 %v235
        %275 = vmatprep.subr.mxu0 0.0
        %276 = vmatpush1.msra.mxu0 %v234
        %277 = vmatprep.subr.mxu0 0.0
        %278 = vmatpush1.msra.mxu0 %v233
        %279 = vmatprep.subr.mxu0 0.0
        %280 = vmatpush2.msra.mxu0 0.0
        %281 = vmatprep.subr.mxu0 0.0
        %282 = vmatpush2.msra.mxu0 0.0
        %283 = vmatprep.subr.mxu0 0.0
        %284 = vmatpush2.msra.mxu0 0.0
        %285 = vmatprep.subr.mxu0 0.0
        %286 = vmatpush2.msra.mxu0 0.0
        %287 = vmatprep.subr.mxu0 0.0
        %288 = vmatpush2.msra.mxu0 0.0
        %289 = vmatprep.subr.mxu0 0.0
        %290 = vmatpush2.msra.mxu0 0.0
        %291 = vmatprep.subr.mxu0 0.0
        %292 = vmatpush2.msra.mxu0 0.0
        %293 = vmatprep.subr.mxu0 0.0
        %294 = vmatpush2.msra.mxu0 0.0
        %295 = vmatprep.subr.mxu0 0.0
        %296 = vmatpush2.msra.mxu0 0.0
        %297 = vmatprep.subr.mxu0 0.0
        %298 = vmatpush2.msra.mxu0 0.0
        %299 = vmatprep.subr.mxu0 0.0
        %300 = vmatpush2.msra.mxu0 0.0
        %301 = vmatprep.subr.mxu0 0.0
        %302 = vmatpush2.msra.mxu0 0.0
        %303 = vmatprep.subr.mxu0 0.0
        %304 = vmatpush2.msra.mxu0 0.0
        %305 = vmatprep.subr.mxu0 0.0
        %306 = vmatpush2.msra.mxu0 0.0
        %307 = vmatprep.subr.mxu0 0.0
        %308 = vmatpush2.msra.mxu0 0.0
        %309 = vmatprep.subr.mxu0 0.0
        %310 = vmatpush2.msra.mxu0 0.0
        %311 = vmatprep.mubr.f32.mxu0 0.0
        %312 = vmatmul.mubr.f32.gmra.mxu0 %v245
        %v313 = vpop.f32.mrf.mxu0
        %v314 = vadd.f32 %v242, %v313
        %v315 = vpop.f32.mrf.mxu0
        %316 = vdwg.mxu0
        %317 = vmax.xlane.f32.xlu0 %v314
        %v318 = vpop.xlane.xlu0 %317
        %v319 = vsub.f32 %v314, %v318
        %v320 = vmul.f32 %v319, 1.442695
        %v321 = vpow.pop %v320
        %322 = vadd.xlane.f32.xlu0 %v321
        %v323 = vpop.xlane.xlu0 %322
        %v324 = vlog2.pop %v323
        %v325 = vmul.f32 %v324, 0.6931472
        %v326 = vsub.f32 %v319, %v325
        %327 = vst [vmem:[%s220] sm:$0xff] %v326
        %s328 = sand.u32 %s113, 1
        %s329 = scalar_lea.sflag [#allocation4], %s328
        %s330 = sand.u32 %s113, 1
        %s331 = smul.addr %s330, 8
        %s332 = scalar_lea.vmem [#allocation7], %s331
        // Predicated region
        $region41: #{tpu_custom_call.1} parent=31 // pred_check
          %p333 = pneg %p123
        $region42: #{tpu_custom_call.1} parent=31 // pred_check_branch
          %335 = sbr.rel (%p333) target = $region44
        $region43: #{tpu_custom_call.1} parent=31 // pred_region
          %s337 = ssub.s32 128, 128
          %338 = vsyncadd %s329, %s337
          %s339 = sadd.s32 %s26, %s25
          %s340 = smul.addr %s339, 128
          %s341 = scalar_lea.hbm %s3, %s340
          %s343 = sshll.u32 %s332, 4
          %s344 = int_to_ptr.vmem [resolvable:$true] %s343
          %346 = dma.vmem_to_hbm [thread:$0]  %s344, 128, %s341, %s329
        $region44: #{tpu_custom_call.1} parent=31 // pred_fallthru
          _
      $region32: #{tpu_custom_call.1} parent=5 // pred_fallthru
        _
      %p347 = scmp.le.s32.totalorder 2, %s16
      // Predicated region
      $region45: #{tpu_custom_call.1} parent=5 // pred_check
        %p348 = pneg %p347
      $region46: #{tpu_custom_call.1} parent=5 // pred_check_branch
        %350 = sbr.rel (%p348) target = $region48
      $region47: #{tpu_custom_call.1} parent=5 // pred_region
        %s351 = ssub.s32 %s16, 2
        // Predicated region
        $region49: #{tpu_custom_call.1} parent=47 // pred_check
          %p352 = pneg %p129
        $region50: #{tpu_custom_call.1} parent=47 // pred_check_branch
          %354 = sbr.rel (%p352) target = $region52
        $region51: #{tpu_custom_call.1} parent=47 // pred_region
          %s355 = sand.u32 %s114, 1
          %s356 = scalar_lea.sflag [#allocation4], %s355
          %s357 = sand.u32 %s114, 1
          %s358 = smul.addr %s357, 8
          %s359 = scalar_lea.vmem [#allocation7], %s358
          %360 = dma.done %s356, 128
        $region52: #{tpu_custom_call.1} parent=47 // pred_fallthru
          _
      $region48: #{tpu_custom_call.1} parent=5 // pred_fallthru
        _
    $region6: #{tpu_custom_call.1} parent=1 // loop_footer
      %s20 = sadd.s32 1, %s16
    $region7: #{tpu_custom_call.1} parent=1 // loop_footer_branch
      %15 = sbr.rel target = $region3
    $region8: #{tpu_custom_call.1} parent=1 // loop_exit
      _
    %361 = vsyncpa [#allocation3], 1
    %s362 = scalar_lea.sflag [#allocation3], 1
    %363 = vsyncpa %s362, 1
    %364 = vsyncpa [#allocation6], 1
    %365 = vsyncpa [#allocation4], 1
    %s366 = scalar_lea.sflag [#allocation4], 1
    %367 = vsyncpa %s366, 1

</llo_original>
